<compile_context>
chip_gen: v5e
topology: v5e:2x2
jax: 0.10.0
libtpu: 0.0.40
codegen_flags: <defaults>
</compile_context>

<pallas_src>
from typing import NamedTuple

import jax
import jax.numpy as jnp
from jax.experimental import pallas as pl
from jax.experimental.pallas import tpu as pltpu


def _round_up(x, m):
    return ((x + m - 1) // m) * m


def _cdiv(a, b):
    return -(-a // b)


def _pick_k_tile(c_pad, k_tile_max):
    """Largest 128-multiple that divides c_pad and is <= k_tile_max."""
    if c_pad <= k_tile_max:
        return c_pad
    units = c_pad // 128
    best = 1
    for d in range(1, units + 1):
        if units % d == 0 and 128 * d <= k_tile_max:
            best = d
    return 128 * best


class FastRCNNParams(NamedTuple):
    """Pre-fused, pre-padded, pre-cast parameters (computed once)."""
    w_fused: jax.Array     # [c_pad, out_pad] bf16  (concat of cls + bbox weights)
    b_fused: jax.Array     # [1, out_pad] f32       (concat of cls + bbox biases)
    in_channels: int
    num_classes: int
    num_bbox: int


def prepare_fast_rcnn_params(w_cls_t, b_cls, w_bbox_t, b_bbox):
    """Fuse the two Linear layers into one padded bf16 matmul operand.

    w_cls_t: [C, num_classes], w_bbox_t: [C, 4*num_classes] (pre-transposed).
    Done ONCE per model; keeps the per-forward path free of weight traffic.
    """
    C, num_classes = w_cls_t.shape
    num_bbox = w_bbox_t.shape[1]
    out_dim = num_classes + num_bbox

    c_pad = _round_up(max(C, 1), 128)
    out_pad = _round_up(max(out_dim, 1), 128)

    w = jnp.concatenate([w_cls_t, w_bbox_t], axis=1)                 # [C, out_dim]
    w = jnp.pad(w, ((0, c_pad - C), (0, out_pad - out_dim)))
    w = w.astype(jnp.bfloat16)                                       # MXU operand

    b = jnp.concatenate([b_cls, b_bbox]).astype(jnp.float32).reshape(1, out_dim)
    b = jnp.pad(b, ((0, 0), (0, out_pad - out_dim)))                 # f32 bias add

    return FastRCNNParams(w, b, C, num_classes, num_bbox)


def _fused_head_kernel(x_ref, w_ref, b_ref, out_ref, acc_ref):
    """One fused (cls + bbox) matmul tile: bf16 MXU, f32 accumulate + bias."""
    k = pl.program_id(1)

    @pl.when(k == 0)
    def _():
        acc_ref[...] = jnp.zeros_like(acc_ref)

    # Cast x to bf16 on the VPU (free under the MXU); weight is already bf16.
    acc_ref[...] += jnp.dot(x_ref[...].astype(jnp.bfloat16), w_ref[...],
                            preferred_element_type=jnp.float32)

    @pl.when(k == pl.num_programs(1) - 1)
    def _():
        out_ref[...] = (acc_ref[...] + b_ref[...]).astype(out_ref.dtype)


def fast_rcnn_predictor(x, params: FastRCNNParams, *, tile_n=1024,
                        k_tile_max=4096):
    """FastRCNNPredictor forward.

    x: [N, C, 1, 1] or [N, C].  Returns (scores [N, num_classes],
    bbox_deltas [N, 4*num_classes]).
    """
    if x.ndim == 4:
        assert x.shape[2:] == (1, 1), (
            f"x has the wrong shape, expecting the last two dimensions to be "
            f"[1,1] instead of {list(x.shape[2:])}")
    x2 = x.reshape(x.shape[0], -1)                       # flatten(start_dim=1)

    N, C = x2.shape
    assert C == params.in_channels, (C, params.in_channels)
    c_pad, out_pad = params.w_fused.shape
    num_classes, num_bbox = params.num_classes, params.num_bbox
    out_dim = num_classes + num_bbox
    out_dtype = x2.dtype

    # Only pad the contraction dim when it is not already 128-aligned (the
    # common FastRCNN sizes 1024 / 12544 skip this).  Zero pad => exact.
    if c_pad != C:
        x2 = jnp.pad(x2, ((0, 0), (0, c_pad - C)))

    # Contraction tile: single block for moderate C, K-tiled for large C so
    # the resident weight stays a few MiB (fits v7x VMEM even double-buffered).
    tk = _pick_k_tile(c_pad, k_tile_max)
    k_steps = c_pad // tk

    # Row tile: multiple of 16 (bf16 packs 16 sublanes/vreg); keep >= 2 grid
    # steps when N is large enough so the "parallel" axis shards across v7x's
    # two TensorCores.  No row padding: partial last block is masked.
    tile_n_eff = max(16, min(tile_n, _round_up(_cdiv(max(N, 1), 2), 16)))
    n_steps = _cdiv(max(N, 1), tile_n_eff)

    grid = (n_steps, k_steps)

    # VMEM footprint (double-buffered inputs/outputs + accumulator); clamp to
    # a range that is valid on every generation (v7x has 64 MiB / TC).
    vmem_bytes = (2 * tile_n_eff * tk * x2.dtype.itemsize     # x blocks
                  + 2 * tk * out_pad * 2                      # bf16 weight
                  + 2 * out_pad * 4                           # bias
                  + 2 * tile_n_eff * out_pad * 4              # output blocks
                  + tile_n_eff * out_pad * 4)                 # f32 accumulator
    vmem_limit = int(min(64 * 1024 * 1024,
                         max(32 * 1024 * 1024, int(vmem_bytes * 1.5))))

    cost = pl.CostEstimate(
        flops=2 * N * c_pad * out_pad,
        transcendentals=0,
        bytes_accessed=(x2.size * x2.dtype.itemsize
                        + params.w_fused.size * 2
                        + params.b_fused.size * 4
                        + N * out_pad * jnp.dtype(out_dtype).itemsize),
    )

    fused_out = pl.pallas_call(
        _fused_head_kernel,
        out_shape=jax.ShapeDtypeStruct((N, out_pad), out_dtype),
        grid_spec=pltpu.PrefetchScalarGridSpec(
            num_scalar_prefetch=0,
            grid=grid,
            in_specs=[
                # x tile marches over rows (i) and the contraction (k).
                pl.BlockSpec((tile_n_eff, tk), lambda i, k: (i, k)),
                # Fused weight marches only over k; revisited per row tile.
                pl.BlockSpec((tk, out_pad), lambda i, k: (k, 0)),
                # Bias stays resident.
                pl.BlockSpec((1, out_pad), lambda i, k: (0, 0)),
            ],
            out_specs=pl.BlockSpec((tile_n_eff, out_pad), lambda i, k: (i, 0)),
            scratch_shapes=[pltpu.VMEM((tile_n_eff, out_pad), jnp.float32)],
        ),
        compiler_params=pltpu.CompilerParams(
            dimension_semantics=("parallel", "arbitrary"),
            vmem_limit_bytes=vmem_limit,
        ),
        cost_estimate=cost,
    )(x2, params.w_fused, params.b_fused)

    # Split the fused lane-padded output back into the two heads.  Keep these
    # slices under the same jit as their consumers so XLA fuses them.
    scores = fused_out[:, :num_classes]
    bbox_deltas = fused_out[:, num_classes:out_dim]
    return scores, bbox_deltas


def init_params(key, in_channels, num_classes, dtype=jnp.float32):
    """Deterministic synthetic init matching nn.Linear shapes.

    cls_score: Linear(in_channels, num_classes)     -> W [num_classes, C], b [num_classes]
    bbox_pred: Linear(in_channels, 4*num_classes)   -> W [4*num_classes, C], b [4*num_classes]
    Weights are returned pre-transposed as [C, out].
    """
    k1, k2, k3, k4 = jax.random.split(key, 4)
    bound = 1.0 / jnp.sqrt(in_channels)
    w_cls = jax.random.uniform(k1, (num_classes, in_channels), dtype,
                               minval=-bound, maxval=bound)
    b_cls = jax.random.uniform(k2, (num_classes,), dtype,
                               minval=-bound, maxval=bound)
    w_bbox = jax.random.uniform(k3, (num_classes * 4, in_channels), dtype,
                                minval=-bound, maxval=bound)
    b_bbox = jax.random.uniform(k4, (num_classes * 4,), dtype,
                                minval=-bound, maxval=bound)
    return w_cls.T, b_cls, w_bbox.T, b_bbox


if __name__ == "__main__":
    key = jax.random.PRNGKey(0)
    kx, kp = jax.random.split(key)

    batch = 2
    in_channels = 32
    num_classes = 8

    # Input in PyTorch 4D pooled-feature form: [N, C, 1, 1]
    x = jax.random.normal(kx, (batch, in_channels, 1, 1), jnp.float32)
    w_cls_t, b_cls, w_bbox_t, b_bbox = init_params(kp, in_channels, num_classes)

    # Weight fusion / padding / bf16 cast happens ONCE here, not per forward.
    params = prepare_fast_rcnn_params(w_cls_t, b_cls, w_bbox_t, b_bbox)

    scores, bbox_deltas = fast_rcnn_predictor(x, params)
    jax.block_until_ready((scores, bbox_deltas))

    # Reference check against plain JAX (f32).  Kernel uses bf16 MXU operands
    # with f32 accumulation -> bf16-appropriate tolerance.
    x2 = x.reshape(batch, -1)
    ref_scores = x2 @ w_cls_t + b_cls
    ref_bbox = x2 @ w_bbox_t + b_bbox
    assert scores.shape == (batch, num_classes)
    assert bbox_deltas.shape == (batch, num_classes * 4)
    assert jnp.allclose(scores, ref_scores, atol=2e-2, rtol=2e-2), (
        jnp.max(jnp.abs(scores - ref_scores)))
    assert jnp.allclose(bbox_deltas, ref_bbox, atol=2e-2, rtol=2e-2), (
        jnp.max(jnp.abs(bbox_deltas - ref_bbox)))

    print("KERNEL_OK")
</pallas_src>

<mosaic_0001>
module attributes {stable_mosaic.version = 11 : i64} {
  func.func @_fused_head_kernel(%arg0: i32, %arg1: i32, %arg2: memref<16x128xf32, #tpu.memory_space<vmem>>, %arg3: memref<128x128xbf16, #tpu.memory_space<vmem>>, %arg4: memref<1x128xf32, #tpu.memory_space<vmem>>, %arg5: memref<16x128xf32, #tpu.memory_space<vmem>>, %arg6: memref<16x128xf32, #tpu.memory_space<vmem>>) attributes {dimension_semantics = [#tpu.dimension_semantics<parallel>, #tpu.dimension_semantics<arbitrary>], iteration_bounds = array<i64: 1, 1>, scalar_prefetch = 0 : i64, scratch_operands = 1 : i64, tpu.core_type = #tpu.core_type<tc>, window_params = [{transform_indices = @transform_0, window_bounds = array<i64: 16, 128>}, {transform_indices = @transform_1, window_bounds = array<i64: 128, 128>}, {pipeline_mode = #tpu.pipeline_mode<synchronous>, transform_indices = @transform_2, window_bounds = array<i64: 1, 128>}, {transform_indices = @transform_3, window_bounds = array<i64: 16, 128>}]} {
    %c0_i32 = arith.constant 0 : i32
    %0 = arith.cmpi eq, %arg1, %c0_i32 : i32
    %1 = arith.extui %0 : i1 to i32
    %c0_i32_0 = arith.constant 0 : i32
    %2 = arith.cmpi ne, %1, %c0_i32_0 : i32
    scf.if %2 {
      %cst_10 = arith.constant 0.000000e+00 : f32
      %13 = vector.broadcast %cst_10 : f32 to vector<16x128xf32>
      %c0_11 = arith.constant 0 : index
      %c0_12 = arith.constant 0 : index
      %14 = vector.load %arg6[%c0_11, %c0_12] : memref<16x128xf32, #tpu.memory_space<vmem>>, vector<16x128xf32>
      tpu.vector_store %arg6[%c0_11, %c0_12], %13 {strides = array<i32>} : memref<16x128xf32, #tpu.memory_space<vmem>>, vector<16x128xf32>,
    } else {
    }
    %c0 = arith.constant 0 : index
    %c0_1 = arith.constant 0 : index
    %3 = vector.load %arg6[%c0, %c0_1] : memref<16x128xf32, #tpu.memory_space<vmem>>, vector<16x128xf32>
    %c0_2 = arith.constant 0 : index
    %c0_3 = arith.constant 0 : index
    %4 = vector.load %arg2[%c0_2, %c0_3] : memref<16x128xf32, #tpu.memory_space<vmem>>, vector<16x128xf32>
    %5 = arith.truncf %4 : vector<16x128xf32> to vector<16x128xbf16>
    %c0_4 = arith.constant 0 : index
    %c0_5 = arith.constant 0 : index
    %6 = vector.load %arg3[%c0_4, %c0_5] : memref<128x128xbf16, #tpu.memory_space<vmem>>, vector<128x128xbf16>
    %cst = arith.constant dense<0.000000e+00> : vector<16x128xf32>
    %7 = tpu.matmul %5, %6, %cst {dimension_numbers = #tpu.dot_dimension_numbers<[1], [0], [0], [1], [0, 0, 1, 1], [], []>} : vector<16x128xbf16>, vector<128x128xbf16>, vector<16x128xf32> -> vector<16x128xf32>
    %8 = arith.addf %3, %7 : vector<16x128xf32>
    %c0_6 = arith.constant 0 : index
    %c0_7 = arith.constant 0 : index
    %9 = vector.load %arg6[%c0_6, %c0_7] : memref<16x128xf32, #tpu.memory_space<vmem>>, vector<16x128xf32>
    tpu.vector_store %arg6[%c0_6, %c0_7], %8 {strides = array<i32>} : memref<16x128xf32, #tpu.memory_space<vmem>>, vector<16x128xf32>,
    %c0_i32_8 = arith.constant 0 : i32
    %10 = arith.cmpi eq, %arg1, %c0_i32_8 : i32
    %11 = arith.extui %10 : i1 to i32
    %c0_i32_9 = arith.constant 0 : i32
    %12 = arith.cmpi ne, %11, %c0_i32_9 : i32
    scf.if %12 {
      %c0_10 = arith.constant 0 : index
      %c0_11 = arith.constant 0 : index
      %13 = vector.load %arg6[%c0_10, %c0_11] : memref<16x128xf32, #tpu.memory_space<vmem>>, vector<16x128xf32>
      %c0_12 = arith.constant 0 : index
      %c0_13 = arith.constant 0 : index
      %14 = vector.load %arg4[%c0_12, %c0_13] : memref<1x128xf32, #tpu.memory_space<vmem>>, vector<1x128xf32>
      %15 = vector.broadcast %14 : vector<1x128xf32> to vector<16x128xf32>
      %16 = arith.addf %13, %15 : vector<16x128xf32>
      %c0_14 = arith.constant 0 : index
      %c0_15 = arith.constant 0 : index
      %17 = vector.load %arg5[%c0_14, %c0_15] : memref<16x128xf32, #tpu.memory_space<vmem>>, vector<16x128xf32>
      tpu.vector_store %arg5[%c0_14, %c0_15], %16 {strides = array<i32>} : memref<16x128xf32, #tpu.memory_space<vmem>>, vector<16x128xf32>,
    } else {
    }
    return
  }
  func.func @transform_0(%arg0: i32, %arg1: i32) -> (i32, i32) {
    %c0_i32 = arith.constant 0 : i32
    return %arg0, %arg1 : i32, i32
  }
  func.func @transform_1(%arg0: i32, %arg1: i32) -> (i32, i32) {
    %c0_i32 = arith.constant 0 : i32
    %c0_i32_0 = arith.constant 0 : i32
    return %arg1, %c0_i32 : i32, i32
  }
  func.func @transform_2(%arg0: i32, %arg1: i32) -> (i32, i32) {
    %c0_i32 = arith.constant 0 : i32
    %c0_i32_0 = arith.constant 0 : i32
    %c0_i32_1 = arith.constant 0 : i32
    return %c0_i32, %c0_i32_0 : i32, i32
  }
  func.func @transform_3(%arg0: i32, %arg1: i32) -> (i32, i32) {
    %c0_i32 = arith.constant 0 : i32
    %c0_i32_0 = arith.constant 0 : i32
    return %arg0, %c0_i32 : i32, i32
  }
}

</mosaic_0001>

<llo_original>
// kernel: tpu_custom_call.1
$region0: #{tpu_custom_call.1}
  #allocation0 [shape = 'u32[]', space=smem, size = 0x4, offset = 0x4, fixed_abs, tag = 'smem constant byte address 0x4 - core index']
  #allocation1 [shape = 'u32[72,128]{1,0:T(1,128)}', space=vmem, size = 0x9000, scoped, tag = 'internal scratch']
  #allocation2 [shape = 'f32[16,128]{1,0:T(8,128)}', space=vmem, size = 0x2000, scoped, tag = 'scratch operand']
  %s0 = inlined_call_operand.hbm [shape: f32[2,128], index: 0, kind: input, shape index: {}]
  %s1 = inlined_call_operand.hbm [shape: bf16[128,128], index: 1, kind: input, shape index: {}]
  %s2 = inlined_call_operand.vmem [shape: f32[1,128], index: 2, kind: input, shape index: {}]
  %s3 = inlined_call_operand.hbm [shape: f32[2,128], index: 3, kind: output, shape index: {}]
  %s4 = sld [smem:[#allocation0]]
  $region38: #{tpu_custom_call.1} parent=0
    _
  %s6 = ssub.s32 1, %s4
  %s7 = scalar_select 0, %s6, %s4
  $region1: #{tpu_custom_call.1} parent=0
    #allocation3 [shape = 'u8[8192]{0}', space=vmem, size = 0x2000, scoped, tag = 'input window, operand 0, single buffered']
    #allocation4 [shape = 's32[1]{0}', space=sflag, size = 0x4, scoped, tag = 'scoped memory for tpu_custom_call.1']
    #allocation5 [shape = 's32[1]{0}', space=sflag, size = 0x4, scoped, tag = 'scoped memory for tpu_custom_call.1']
    #allocation6 [shape = 'u8[32768]{0}', space=vmem, size = 0x8000, scoped, tag = 'input window, operand 1, single buffered']
    #allocation7 [shape = 's32[1]{0}', space=sflag, size = 0x4, scoped, tag = 'scoped memory for tpu_custom_call.1']
    #allocation8 [shape = 'u8[8192]{0}', space=vmem, size = 0x2000, scoped, tag = 'output window, operand 0, single buffered']
    %8 = vsyncpa [#allocation4], 0
    %9 = vsyncpa [#allocation7], 0
    %10 = vsyncpa [#allocation5], 0
    // Predicated region
    $region2: #{tpu_custom_call.1} parent=1 // pred_check
      _
    $region3: #{tpu_custom_call.1} parent=1 // pred_check_branch
      %12 = sbr.rel (0) target = $region5
    $region4: #{tpu_custom_call.1} parent=1 // pred_region
      %14 = vsyncadd [#allocation4], 224
      %s15 = sshll.u32 %s0, 4
      %s16 = int_to_ptr.hbm [resolvable:$true] %s15
      %s17 = sshll.u32 [#allocation3], 4
      %s18 = int_to_ptr.vmem [resolvable:$true] %s17
      %23 = dma.hbm_to_vmem [thread:$0]  %s16, 32, %s18, [#allocation4], 32, 32, 2
    $region5: #{tpu_custom_call.1} parent=1 // pred_fallthru
      _
    // Predicated region
    $region6: #{tpu_custom_call.1} parent=1 // pred_check
      _
    $region7: #{tpu_custom_call.1} parent=1 // pred_check_branch
      %25 = sbr.rel (0) target = $region9
    $region8: #{tpu_custom_call.1} parent=1 // pred_region
      %27 = vsyncadd [#allocation7], 0
      %s28 = sshll.u32 %s1, 4
      %s29 = int_to_ptr.hbm [resolvable:$true] %s28
      %s30 = sshll.u32 [#allocation6], 4
      %s31 = int_to_ptr.vmem [resolvable:$true] %s30
      %36 = dma.hbm_to_vmem [thread:$0]  %s29, 1024, %s31, [#allocation7], 64, 64, 4
    $region9: #{tpu_custom_call.1} parent=1 // pred_fallthru
      _
    // Predicated region
    $region10: #{tpu_custom_call.1} parent=1 // pred_check
      _
    $region11: #{tpu_custom_call.1} parent=1 // pred_check_branch
      %38 = sbr.rel (0) target = $region13
    $region12: #{tpu_custom_call.1} parent=1 // pred_region
      _
    $region13: #{tpu_custom_call.1} parent=1 // pred_fallthru
      _
    // Predicated region
    $region14: #{tpu_custom_call.1} parent=1 // pred_check
      _
    $region15: #{tpu_custom_call.1} parent=1 // pred_check_branch
      %40 = sbr.rel (0) target = $region17
    $region16: #{tpu_custom_call.1} parent=1 // pred_region
      %42 = dma.done [#allocation4], 256
    $region17: #{tpu_custom_call.1} parent=1 // pred_fallthru
      _
    // Predicated region
    $region18: #{tpu_custom_call.1} parent=1 // pred_check
      _
    $region19: #{tpu_custom_call.1} parent=1 // pred_check_branch
      %44 = sbr.rel (0) target = $region21
    $region20: #{tpu_custom_call.1} parent=1 // pred_region
      %46 = dma.done [#allocation7], 1024
    $region21: #{tpu_custom_call.1} parent=1 // pred_fallthru
      _
    %p47 = scmp.eq.s32.totalorder 0, 0
    // Predicated region
    $region22: #{tpu_custom_call.1} parent=1 // pred_check
      %p48 = pneg %p47
    $region23: #{tpu_custom_call.1} parent=1 // pred_check_branch
      %50 = sbr.rel (%p48) target = $region25
    $region24: #{tpu_custom_call.1} parent=1 // pred_region
      %51 = vst [vmem:[#allocation2] sm:$0xff] 0.0
      %52 = vst [vmem:[#allocation2 + $0x8] sm:$0xff] 0.0
    $region25: #{tpu_custom_call.1} parent=1 // pred_fallthru
      _
    %v53 = vld [vmem:[#allocation2] sm:$0xff]
    %v54 = vld [vmem:[#allocation2 + $0x8] sm:$0xff]
    %v55 = vld [vmem:[#allocation3] sm:$0xff]
    %v56 = vld [vmem:[#allocation3 + $0x8] sm:$0xff]
    %v57 = vpack.c.bf16 %v56, %v55
    %v58 = vld [vmem:[#allocation6] sm:$0xf]
    %v59 = vld [vmem:[#allocation6 + $0x4] sm:$0xf]
    %v60 = vld [vmem:[#allocation6 + $0x8] sm:$0xf]
    %v61 = vld [vmem:[#allocation6 + $0xc] sm:$0xf]
    %v62 = vld [vmem:[#allocation6 + $0x10] sm:$0xf]
    %v63 = vld [vmem:[#allocation6 + $0x14] sm:$0xf]
    %v64 = vld [vmem:[#allocation6 + $0x18] sm:$0xf]
    %v65 = vld [vmem:[#allocation6 + $0x1c] sm:$0xf]
    %v66 = vld [vmem:[#allocation6 + $0x20] sm:$0xf]
    %v67 = vld [vmem:[#allocation6 + $0x24] sm:$0xf]
    %v68 = vld [vmem:[#allocation6 + $0x28] sm:$0xf]
    %v69 = vld [vmem:[#allocation6 + $0x2c] sm:$0xf]
    %v70 = vld [vmem:[#allocation6 + $0x30] sm:$0xf]
    %v71 = vld [vmem:[#allocation6 + $0x34] sm:$0xf]
    %v72 = vld [vmem:[#allocation6 + $0x38] sm:$0xf]
    %v73 = vld [vmem:[#allocation6 + $0x3c] sm:$0xf]
    %v90 = vunpack.c.l.b16 %v58
    %v91 = vunpack.c.l.b16 %v59
    %v92 = vunpack.c.l.b16 %v60
    %v93 = vunpack.c.l.b16 %v61
    %v94 = vunpack.c.l.b16 %v62
    %v95 = vunpack.c.l.b16 %v63
    %v96 = vunpack.c.l.b16 %v64
    %v97 = vunpack.c.l.b16 %v65
    %v98 = vunpack.c.l.b16 %v66
    %v99 = vunpack.c.l.b16 %v67
    %v100 = vunpack.c.l.b16 %v68
    %v101 = vunpack.c.l.b16 %v69
    %v102 = vunpack.c.l.b16 %v70
    %v103 = vunpack.c.l.b16 %v71
    %v104 = vunpack.c.l.b16 %v72
    %v105 = vunpack.c.l.b16 %v73
    %v106 = vpack.c.b16 %v91, %v90
    %v107 = vpack.c.b16 %v93, %v92
    %v108 = vpack.c.b16 %v95, %v94
    %v109 = vpack.c.b16 %v97, %v96
    %v110 = vpack.c.b16 %v99, %v98
    %v111 = vpack.c.b16 %v101, %v100
    %v112 = vpack.c.b16 %v103, %v102
    %v113 = vpack.c.b16 %v105, %v104
    %122 = vmatpush.bf16.msra.mxu0 %v113
    %123 = vmatpush.bf16.msra.mxu0 %v112
    %124 = vmatpush.bf16.msra.mxu0 %v111
    %125 = vmatpush.bf16.msra.mxu0 %v110
    %126 = vmatpush.bf16.msra.mxu0 %v109
    %127 = vmatpush.bf16.msra.mxu0 %v108
    %128 = vmatpush.bf16.msra.mxu0 %v107
    %129 = vmatpush.bf16.msra.mxu0 %v106
    %130 = vmatmul.bf16.gmra.mxu0 %v57
    %v131 = vpop.f32.mrf.mxu0
    %v132 = vadd.f32 0.0, %v131
    %v133 = vpop.f32.mrf.mxu0
    %v134 = vadd.f32 0.0, %v133
    %135 = vdwg.mxu0
    %v136 = vadd.f32 %v53, %v132
    %v137 = vadd.f32 %v54, %v134
    %138 = vst [vmem:[#allocation2] sm:$0xff] %v136
    %139 = vst [vmem:[#allocation2 + $0x8] sm:$0xff] %v137
    // Predicated region
    $region26: #{tpu_custom_call.1} parent=1 // pred_check
      %p140 = pneg %p47
    $region27: #{tpu_custom_call.1} parent=1 // pred_check_branch
      %142 = sbr.rel (%p140) target = $region29
    $region28: #{tpu_custom_call.1} parent=1 // pred_region
      %v143 = vld [vmem:[#allocation2] sm:$0xff]
      %v144 = vld [vmem:[#allocation2 + $0x8] sm:$0xff]
      %v145 = vld [vmem:[%s2] sm:$0x1]
      %v147 = vperm.slane %v145, 0
      %v149 = vadd.f32 %v143, %v147
      %v150 = vadd.f32 %v144, %v147
      %151 = vst [vmem:[#allocation8] sm:$0xff] %v149
      %152 = vst [vmem:[#allocation8 + $0x8] sm:$0xff] %v150
    $region29: #{tpu_custom_call.1} parent=1 // pred_fallthru
      _
    // Predicated region
    $region30: #{tpu_custom_call.1} parent=1 // pred_check
      _
    $region31: #{tpu_custom_call.1} parent=1 // pred_check_branch
      %154 = sbr.rel (0) target = $region33
    $region32: #{tpu_custom_call.1} parent=1 // pred_region
      %156 = vsyncadd [#allocation5], 224
      %s157 = sshll.u32 [#allocation8], 4
      %s158 = int_to_ptr.vmem [resolvable:$true] %s157
      %s159 = sshll.u32 %s3, 4
      %s160 = int_to_ptr.hbm [resolvable:$true] %s159
      %165 = dma.vmem_to_hbm [thread:$0]  %s158, 32, %s160, [#allocation5], 32, 32, 2
    $region33: #{tpu_custom_call.1} parent=1 // pred_fallthru
      _
    // Predicated region
    $region34: #{tpu_custom_call.1} parent=1 // pred_check
      _
    $region35: #{tpu_custom_call.1} parent=1 // pred_check_branch
      %167 = sbr.rel (0) target = $region37
    $region36: #{tpu_custom_call.1} parent=1 // pred_region
      %169 = dma.done [#allocation5], 256
    $region37: #{tpu_custom_call.1} parent=1 // pred_fallthru
      _
    %170 = vsyncpa [#allocation4], 1
    %171 = vsyncpa [#allocation7], 1
    %172 = vsyncpa [#allocation5], 1

</llo_original>
